<compile_context>
chip_gen: v5e
topology: v5e:2x2
jax: 0.10.0
libtpu: 0.0.40
codegen_flags: <defaults>
</compile_context>

<pallas_src>
import functools

import jax
import jax.numpy as jnp
from jax.experimental import pallas as pl
from jax.experimental.pallas import tpu as pltpu


# ---------------- "opt" config ----------------
class Opt:
    user_num = 50
    item_num = 60
    vocab_size = 100
    word_dim = 32
    id_emb_size = 32        # must equal attention_size for the elementwise gating in forward()
    attention_size = 32
    r_filters_num = 32
    kernel_size = 3
    doc_len = 16
    drop_out = 0.5
    self_att = False        # TODO(synk): opt.self_att=True (nn.TransformerEncoderLayer) path not ported
    use_word_embedding = False


# ---------------- fused Pallas kernel (both sides, gridded) ----------------
def _nrsg_kernel(doc_ref, convw_ref, idemb_ref, fcw_ref, bias_ref, out_ref,
                 *, kernel_size, att_size):
    """Fused per-(side, batch-block) step:
        im2col CNN + ReLU + mean pool + fused (gate||out) Linear + sigmoid gating.

    doc_ref  : (1, BM, L, D)  f32 embedded doc block (un-padded; pad folded in here)
    convw_ref: (1, K*D, F)    bf16 im2col conv weight for this side
    idemb_ref: (1, BM, A)     f32 id embedding (uid or iid)
    fcw_ref  : (1, F, 2A)     bf16 [fc_gate | fc_out] concatenated weight
    bias_ref : (1, 1, F+2A)   f32 [conv_b | fc_gate_b | fc_out_b] packed biases
    out_ref  : (1, BM, A)     f32 user_feature / item_feature block
    """
    _, BM, L, D = doc_ref.shape
    K = kernel_size
    F = convw_ref.shape[-1]
    A = att_size
    pad = K // 2

    x = doc_ref[0]                                          # (BM, L, D) f32
    zpad = jnp.zeros((BM, pad, D), x.dtype)

    # im2col: tap k holds x shifted by (k - pad) along the doc axis, zeros outside.
    taps = []
    for k in range(K):                                      # small static K -> unrolled
        off = k - pad
        if off < 0:
            tap = jnp.concatenate([zpad[:, :(-off), :], x[:, :L + off, :]], axis=1)
        elif off > 0:
            tap = jnp.concatenate([x[:, off:, :], zpad[:, :off, :]], axis=1)
        else:
            tap = x
        taps.append(tap)
    cols = jnp.concatenate(taps, axis=-1)                   # (BM, L, K*D)
    cols = cols.reshape(BM * L, K * D).astype(jnp.bfloat16)

    biases = bias_ref[0]                                    # (1, F + 2A) f32
    conv_b = biases[:, :F]
    fc_b = biases[:, F:]

    # Single 96-deep bf16 contraction for all K conv taps, f32 accumulation.
    conv = jnp.dot(cols, convw_ref[0], preferred_element_type=jnp.float32)   # (BM*L, F)
    conv = jnp.maximum(conv + conv_b, 0.0)                  # conv bias + ReLU
    fea = jnp.mean(conv.reshape(BM, L, F), axis=1)          # mean over doc_len -> (BM, F) f32

    # One fused matmul for [gate | out] Linears, split with static lane slices.
    h = jnp.dot(fea.astype(fcw_ref.dtype), fcw_ref[0],
                preferred_element_type=jnp.float32) + fc_b  # (BM, 2A) f32
    idv = idemb_ref[0]                                      # (BM, A) f32
    gate = 1.0 - jax.nn.sigmoid(idv * h[:, :A])             # 1 - sigmoid(id_emb * fc_gate(fea))
    out_ref[0] = gate + idv + h[:, A:]                      # gate + id_emb + fc_out(fea)


def _nrsg_call(docs, convw, id_emb, fcw, biases, opt):
    S, B, L, D = docs.shape                                 # S == 2 (user, item)
    K = opt.kernel_size
    F = convw.shape[-1]
    A = opt.attention_size
    BM = B if B <= 128 else 128                             # v7x-safe batch block (tiny VMEM footprint)
    nb = pl.cdiv(B, BM)
    kernel = functools.partial(_nrsg_kernel, kernel_size=K, att_size=A)
    return pl.pallas_call(
        kernel,
        out_shape=jax.ShapeDtypeStruct((S, B, A), jnp.float32),
        grid_spec=pltpu.PrefetchScalarGridSpec(
            num_scalar_prefetch=0,
            grid=(S, nb),
            in_specs=[
                pl.BlockSpec((1, BM, L, D), lambda s, b: (s, b, 0, 0)),
                pl.BlockSpec((1, K * D, F), lambda s, b: (s, 0, 0)),
                pl.BlockSpec((1, BM, A), lambda s, b: (s, b, 0)),
                pl.BlockSpec((1, F, 2 * A), lambda s, b: (s, 0, 0)),
                pl.BlockSpec((1, 1, F + 2 * A), lambda s, b: (s, 0, 0)),
            ],
            out_specs=pl.BlockSpec((1, BM, A), lambda s, b: (s, b, 0)),
        ),
        compiler_params=pltpu.CompilerParams(
            dimension_semantics=("parallel", "parallel")),
    )(docs, convw, id_emb, fcw, biases)


# ---------------- parameters (deterministic, in-script) ----------------
def init_params(opt, key):
    ks = jax.random.split(key, 9)

    def xavier(k, shape, fan_in, fan_out):
        std = (2.0 / (fan_in + fan_out)) ** 0.5
        return std * jax.random.normal(k, shape, jnp.float32)

    def lin_w(k, shape):  # uniform(-0.1, 0.1), stored as (in, out)
        return jax.random.uniform(k, shape, jnp.float32, -0.1, 0.1)

    K, D, F, A = opt.kernel_size, opt.word_dim, opt.r_filters_num, opt.attention_size
    p = {}
    p["word_embs"] = xavier(ks[0], (opt.vocab_size, D), opt.vocab_size, D)
    p["uid_embedding"] = jax.random.uniform(ks[1], (opt.user_num, opt.id_emb_size),
                                            jnp.float32, -1.0, 1.0)
    p["iid_embedding"] = jax.random.uniform(ks[2], (opt.item_num, opt.id_emb_size),
                                            jnp.float32, -1.0, 1.0)
    # Conv2d(1, F, (K, D)) weights: torch (F, 1, K, D) -> stored (K, D, F); bias init 0.1.
    # Matmul weights kept in bf16 for the MXU; accumulation stays f32 in the kernel.
    p["user_cnn_w"] = xavier(ks[3], (K, D, F), K * D, F).astype(jnp.bfloat16)
    p["user_cnn_b"] = jnp.full((1, F), 0.1, jnp.float32)
    p["item_cnn_w"] = xavier(ks[4], (K, D, F), K * D, F).astype(jnp.bfloat16)
    p["item_cnn_b"] = jnp.full((1, F), 0.1, jnp.float32)
    p["fc_u_w"] = lin_w(ks[5], (F, A)).astype(jnp.bfloat16)
    p["fc_u_b"] = jnp.full((1, A), 0.1, jnp.float32)
    p["fc_i_w"] = lin_w(ks[6], (F, A)).astype(jnp.bfloat16)
    p["fc_i_b"] = jnp.full((1, A), 0.1, jnp.float32)
    p["fc_1_w"] = lin_w(ks[7], (F, A)).astype(jnp.bfloat16)
    p["fc_1_b"] = jnp.full((1, A), 0.1, jnp.float32)
    p["fc_2_w"] = lin_w(ks[8], (F, A)).astype(jnp.bfloat16)
    p["fc_2_b"] = jnp.full((1, A), 0.1, jnp.float32)
    return p


# ---------------- NRSG.forward ----------------
def nrsg_forward(params, opt, review, user_doc, item_doc, review_len, max_num,
                 id1, id2, ui2id, ui_att, uori):
    # review / review_len / max_num / ui2id / ui_att / uori are unused by the
    # original forward; kept for signature parity.
    del review, review_len, max_num, ui2id, ui_att, uori
    K, D, F, A = opt.kernel_size, opt.word_dim, opt.r_filters_num, opt.attention_size

    # Embedding gathers (glue); both sides stacked on a leading axis of size 2.
    docs = jnp.stack([params["word_embs"][user_doc],
                      params["word_embs"][item_doc]], axis=0)            # (2, B, L, D)
    id_emb = jnp.stack([params["uid_embedding"][id1],
                        params["iid_embedding"][id2]], axis=0)           # (2, B, A)

    # Packed weights: im2col conv weight, concatenated [gate|out] fc weight,
    # all biases in one row — stacked (user, item).
    convw = jnp.stack([params["user_cnn_w"].reshape(K * D, F),
                       params["item_cnn_w"].reshape(K * D, F)], axis=0)  # (2, K*D, F) bf16
    fcw = jnp.stack(
        [jnp.concatenate([params["fc_u_w"], params["fc_1_w"]], axis=1),
         jnp.concatenate([params["fc_i_w"], params["fc_2_w"]], axis=1)], axis=0)  # (2, F, 2A) bf16
    biases = jnp.stack(
        [jnp.concatenate([params["user_cnn_b"], params["fc_u_b"], params["fc_1_b"]], axis=1),
         jnp.concatenate([params["item_cnn_b"], params["fc_i_b"], params["fc_2_b"]], axis=1)],
        axis=0)                                                           # (2, 1, F+2A) f32

    # TODO(synk): the opt.self_att == True branch (nn.TransformerEncoderLayer on the
    # concatenated doc features) is not ported; running with self_att=False semantics.
    out = _nrsg_call(docs, convw, id_emb, fcw, biases, opt)               # (2, B, A)
    return out[0], out[1]


# ---------------- pure-JAX reference for verification ----------------
def reference_forward(params, opt, user_doc, item_doc, id1, id2):
    pad = opt.kernel_size // 2
    L = opt.doc_len

    def side(doc_idx, id_emb, cw, cb, wg, bg, wo, bo):
        x = params["word_embs"][doc_idx]                                  # (B, L, D) f32
        xp = jnp.pad(x, ((0, 0), (pad, pad), (0, 0)))
        conv = sum(jnp.einsum("bld,df->blf",
                              xp[:, k:k + L, :].astype(jnp.bfloat16), cw[k],
                              preferred_element_type=jnp.float32)
                   for k in range(opt.kernel_size))
        conv = jax.nn.relu(conv + cb[0])
        fea = conv.mean(axis=1)
        fea16 = fea.astype(jnp.bfloat16)
        h_gate = jnp.einsum("bf,fa->ba", fea16, wg,
                            preferred_element_type=jnp.float32) + bg[0]
        h_out = jnp.einsum("bf,fa->ba", fea16, wo,
                           preferred_element_type=jnp.float32) + bo[0]
        gate = 1.0 - jax.nn.sigmoid(id_emb * h_gate)
        return gate + id_emb + h_out

    u = side(user_doc, params["uid_embedding"][id1],
             params["user_cnn_w"], params["user_cnn_b"],
             params["fc_u_w"], params["fc_u_b"], params["fc_1_w"], params["fc_1_b"])
    i = side(item_doc, params["iid_embedding"][id2],
             params["item_cnn_w"], params["item_cnn_b"],
             params["fc_i_w"], params["fc_i_b"], params["fc_2_w"], params["fc_2_b"])
    return u, i


if __name__ == "__main__":
    opt = Opt()
    B = 2
    key = jax.random.PRNGKey(0)
    kp, k1, k2, k3, k4 = jax.random.split(key, 5)

    params = init_params(opt, kp)
    user_doc = jax.random.randint(k1, (B, opt.doc_len), 0, opt.vocab_size, jnp.int32)
    item_doc = jax.random.randint(k2, (B, opt.doc_len), 0, opt.vocab_size, jnp.int32)
    id1 = jax.random.randint(k3, (B,), 0, opt.user_num, jnp.int32)
    id2 = jax.random.randint(k4, (B,), 0, opt.item_num, jnp.int32)

    user_feature, item_feature = nrsg_forward(
        params, opt,
        review=None, user_doc=user_doc, item_doc=item_doc,
        review_len=None, max_num=None, id1=id1, id2=id2,
        ui2id=None, ui_att=None, uori="user")
    jax.block_until_ready((user_feature, item_feature))

    ref_u, ref_i = reference_forward(params, opt, user_doc, item_doc, id1, id2)
    assert user_feature.shape == (B, opt.attention_size)
    assert item_feature.shape == (B, opt.attention_size)
    assert jnp.allclose(user_feature, ref_u, atol=1e-3, rtol=1e-3)
    assert jnp.allclose(item_feature, ref_i, atol=1e-3, rtol=1e-3)
    print("KERNEL_OK")
</pallas_src>

<mosaic_0001>
module attributes {stable_mosaic.version = 11 : i64} {
  func.func @_nrsg_kernel(%arg0: i32, %arg1: i32, %arg2: memref<1x2x16x32xf32, #tpu.memory_space<vmem>>, %arg3: memref<1x96x32xbf16, #tpu.memory_space<vmem>>, %arg4: memref<1x2x32xf32, #tpu.memory_space<vmem>>, %arg5: memref<1x32x64xbf16, #tpu.memory_space<vmem>>, %arg6: memref<1x1x96xf32, #tpu.memory_space<vmem>>, %arg7: memref<1x2x32xf32, #tpu.memory_space<vmem>>) attributes {dimension_semantics = [#tpu.dimension_semantics<parallel>, #tpu.dimension_semantics<parallel>], iteration_bounds = array<i64: 2, 1>, scalar_prefetch = 0 : i64, scratch_operands = 0 : i64, tpu.core_type = #tpu.core_type<tc>, window_params = [{transform_indices = @transform_0, window_bounds = array<i64: 1, 2, 16, 32>}, {transform_indices = @transform_1, window_bounds = array<i64: 1, 96, 32>}, {transform_indices = @transform_2, window_bounds = array<i64: 1, 2, 32>}, {transform_indices = @transform_3, window_bounds = array<i64: 1, 32, 64>}, {transform_indices = @transform_4, window_bounds = array<i64: 1, 1, 96>}, {transform_indices = @transform_5, window_bounds = array<i64: 1, 2, 32>}]} {
    %c0 = arith.constant 0 : index
    %c0_0 = arith.constant 0 : index
    %c0_1 = arith.constant 0 : index
    %c0_2 = arith.constant 0 : index
    %0 = vector.load %arg2[%c0, %c0_0, %c0_1, %c0_2] : memref<1x2x16x32xf32, #tpu.memory_space<vmem>>, vector<1x2x16x32xf32>
    %1 = vector.shape_cast %0 : vector<1x2x16x32xf32> to vector<2x16x32xf32>
    %cst = arith.constant 0.000000e+00 : f32
    %2 = vector.broadcast %cst : f32 to vector<2x1x32xf32>
    %3 = vector.extract_strided_slice %1 {offsets = [0, 0, 0], sizes = [2, 15, 32], strides = [1, 1, 1]} : vector<2x16x32xf32> to vector<2x15x32xf32>
    %4 = tpu.concatenate %2, %3 in 1 : vector<2x1x32xf32>, vector<2x15x32xf32> -> vector<2x16x32xf32>
    %5 = vector.extract_strided_slice %1 {offsets = [0, 1, 0], sizes = [2, 15, 32], strides = [1, 1, 1]} : vector<2x16x32xf32> to vector<2x15x32xf32>
    %6 = tpu.concatenate %5, %2 in 1 : vector<2x15x32xf32>, vector<2x1x32xf32> -> vector<2x16x32xf32>
    %7 = tpu.concatenate %4, %1, %6 in 2 : vector<2x16x32xf32>, vector<2x16x32xf32>, vector<2x16x32xf32> -> vector<2x16x96xf32>
    %8 = vector.shape_cast %7 : vector<2x16x96xf32> to vector<32x96xf32>
    %9 = arith.truncf %8 : vector<32x96xf32> to vector<32x96xbf16>
    %c0_3 = arith.constant 0 : index
    %c0_4 = arith.constant 0 : index
    %c0_5 = arith.constant 0 : index
    %10 = vector.load %arg6[%c0_3, %c0_4, %c0_5] : memref<1x1x96xf32, #tpu.memory_space<vmem>>, vector<1x1x96xf32>
    %11 = vector.shape_cast %10 : vector<1x1x96xf32> to vector<1x96xf32>
    %12 = vector.extract_strided_slice %11 {offsets = [0, 0], sizes = [1, 32], strides = [1, 1]} : vector<1x96xf32> to vector<1x32xf32>
    %13 = vector.extract_strided_slice %11 {offsets = [0, 32], sizes = [1, 64], strides = [1, 1]} : vector<1x96xf32> to vector<1x64xf32>
    %c0_6 = arith.constant 0 : index
    %c0_7 = arith.constant 0 : index
    %c0_8 = arith.constant 0 : index
    %14 = vector.load %arg3[%c0_6, %c0_7, %c0_8] : memref<1x96x32xbf16, #tpu.memory_space<vmem>>, vector<1x96x32xbf16>
    %15 = vector.shape_cast %14 : vector<1x96x32xbf16> to vector<96x32xbf16>
    %cst_9 = arith.constant dense<0.000000e+00> : vector<32x32xf32>
    %16 = tpu.matmul %9, %15, %cst_9 {dimension_numbers = #tpu.dot_dimension_numbers<[1], [0], [0], [1], [0, 0, 1, 1], [], []>} : vector<32x96xbf16>, vector<96x32xbf16>, vector<32x32xf32> -> vector<32x32xf32>
    %17 = vector.broadcast %12 : vector<1x32xf32> to vector<32x32xf32>
    %18 = arith.addf %16, %17 : vector<32x32xf32>
    %cst_10 = arith.constant 0.000000e+00 : f32
    %19 = vector.broadcast %cst_10 : f32 to vector<32x32xf32>
    %20 = arith.maximumf %18, %19 : vector<32x32xf32>
    %21 = vector.shape_cast %20 : vector<32x32xf32> to vector<2x16x32xf32>
    %cst_11 = arith.constant dense<0.000000e+00> : vector<2x32xf32>
    %22 = vector.multi_reduction <add>, %21, %cst_11 [1] : vector<2x16x32xf32> to vector<2x32xf32>
    %cst_12 = arith.constant 1.600000e+01 : f32
    %23 = vector.broadcast %cst_12 : f32 to vector<2x32xf32>
    %24 = arith.divf %22, %23 : vector<2x32xf32>
    %25 = arith.truncf %24 : vector<2x32xf32> to vector<2x32xbf16>
    %c0_13 = arith.constant 0 : index
    %c0_14 = arith.constant 0 : index
    %c0_15 = arith.constant 0 : index
    %26 = vector.load %arg5[%c0_13, %c0_14, %c0_15] : memref<1x32x64xbf16, #tpu.memory_space<vmem>>, vector<1x32x64xbf16>
    %27 = vector.shape_cast %26 : vector<1x32x64xbf16> to vector<32x64xbf16>
    %cst_16 = arith.constant dense<0.000000e+00> : vector<2x64xf32>
    %28 = tpu.matmul %25, %27, %cst_16 {dimension_numbers = #tpu.dot_dimension_numbers<[1], [0], [0], [1], [0, 0, 1, 1], [], []>} : vector<2x32xbf16>, vector<32x64xbf16>, vector<2x64xf32> -> vector<2x64xf32>
    %29 = vector.broadcast %13 : vector<1x64xf32> to vector<2x64xf32>
    %30 = arith.addf %28, %29 : vector<2x64xf32>
    %c0_17 = arith.constant 0 : index
    %c0_18 = arith.constant 0 : index
    %c0_19 = arith.constant 0 : index
    %31 = vector.load %arg4[%c0_17, %c0_18, %c0_19] : memref<1x2x32xf32, #tpu.memory_space<vmem>>, vector<1x2x32xf32>
    %32 = vector.shape_cast %31 : vector<1x2x32xf32> to vector<2x32xf32>
    %33 = vector.extract_strided_slice %30 {offsets = [0, 0], sizes = [2, 32], strides = [1, 1]} : vector<2x64xf32> to vector<2x32xf32>
    %34 = arith.mulf %32, %33 : vector<2x32xf32>
    %35 = arith.negf %34 : vector<2x32xf32>
    %36 = math.exp %35 : vector<2x32xf32>
    %cst_20 = arith.constant 1.000000e+00 : f32
    %37 = vector.broadcast %cst_20 : f32 to vector<2x32xf32>
    %38 = arith.addf %37, %36 : vector<2x32xf32>
    %39 = arith.divf %37, %38 : vector<2x32xf32>
    %cst_21 = arith.constant 1.000000e+00 : f32
    %40 = vector.broadcast %cst_21 : f32 to vector<2x32xf32>
    %41 = arith.subf %40, %39 : vector<2x32xf32>
    %42 = arith.addf %41, %32 : vector<2x32xf32>
    %43 = vector.extract_strided_slice %30 {offsets = [0, 32], sizes = [2, 32], strides = [1, 1]} : vector<2x64xf32> to vector<2x32xf32>
    %44 = arith.addf %42, %43 : vector<2x32xf32>
    %c0_22 = arith.constant 0 : index
    %c0_23 = arith.constant 0 : index
    %c0_24 = arith.constant 0 : index
    %45 = vector.load %arg7[%c0_22, %c0_23, %c0_24] : memref<1x2x32xf32, #tpu.memory_space<vmem>>, vector<1x2x32xf32>
    %46 = vector.shape_cast %45 : vector<1x2x32xf32> to vector<2x32xf32>
    %47 = vector.shape_cast %44 : vector<2x32xf32> to vector<1x2x32xf32>
    tpu.vector_store %arg7[%c0_22, %c0_23, %c0_24], %47 {strides = array<i32>} : memref<1x2x32xf32, #tpu.memory_space<vmem>>, vector<1x2x32xf32>,
    return
  }
  func.func @transform_0(%arg0: i32, %arg1: i32) -> (i32, i32, i32, i32) {
    %c0_i32 = arith.constant 0 : i32
    %c0_i32_0 = arith.constant 0 : i32
    %c0_i32_1 = arith.constant 0 : i32
    return %arg0, %arg1, %c0_i32, %c0_i32_0 : i32, i32, i32, i32
  }
  func.func @transform_1(%arg0: i32, %arg1: i32) -> (i32, i32, i32) {
    %c0_i32 = arith.constant 0 : i32
    %c0_i32_0 = arith.constant 0 : i32
    %c0_i32_1 = arith.constant 0 : i32
    return %arg0, %c0_i32, %c0_i32_0 : i32, i32, i32
  }
  func.func @transform_2(%arg0: i32, %arg1: i32) -> (i32, i32, i32) {
    %c0_i32 = arith.constant 0 : i32
    %c0_i32_0 = arith.constant 0 : i32
    return %arg0, %arg1, %c0_i32 : i32, i32, i32
  }
  func.func @transform_3(%arg0: i32, %arg1: i32) -> (i32, i32, i32) {
    %c0_i32 = arith.constant 0 : i32
    %c0_i32_0 = arith.constant 0 : i32
    %c0_i32_1 = arith.constant 0 : i32
    return %arg0, %c0_i32, %c0_i32_0 : i32, i32, i32
  }
  func.func @transform_4(%arg0: i32, %arg1: i32) -> (i32, i32, i32) {
    %c0_i32 = arith.constant 0 : i32
    %c0_i32_0 = arith.constant 0 : i32
    %c0_i32_1 = arith.constant 0 : i32
    return %arg0, %c0_i32, %c0_i32_0 : i32, i32, i32
  }
  func.func @transform_5(%arg0: i32, %arg1: i32) -> (i32, i32, i32) {
    %c0_i32 = arith.constant 0 : i32
    %c0_i32_0 = arith.constant 0 : i32
    return %arg0, %arg1, %c0_i32 : i32, i32, i32
  }
}

</mosaic_0001>

<llo_original>
// kernel: tpu_custom_call.1
$region0: #{tpu_custom_call.1}
  #allocation0 [shape = 'u32[]', space=smem, size = 0x4, offset = 0x4, fixed_abs, tag = 'smem constant byte address 0x4 - core index']
  #allocation1 [shape = 'u32[72,128]{1,0:T(1,128)}', space=vmem, size = 0x9000, scoped, tag = 'internal scratch']
  %s0 = inlined_call_operand.vmem [shape: f32[2,2,16,32], index: 0, kind: input, shape index: {}]
  %s1 = inlined_call_operand.vmem [shape: bf16[2,96,32], index: 1, kind: input, shape index: {}]
  %s2 = inlined_call_operand.vmem [shape: f32[2,2,32], index: 2, kind: input, shape index: {}]
  %s3 = inlined_call_operand.vmem [shape: bf16[2,32,64], index: 3, kind: input, shape index: {}]
  %s4 = inlined_call_operand.vmem [shape: f32[2,1,96], index: 4, kind: input, shape index: {}]
  %s5 = inlined_call_operand.hbm [shape: f32[2,2,32], index: 5, kind: output, shape index: {}]
  %s6 = sld [smem:[#allocation0]]
  $region53: #{tpu_custom_call.1} parent=0
    _
  %s8 = ssub.s32 1, %s6
  %s9 = scalar_select 0, %s8, %s6
  $region1: #{tpu_custom_call.1} parent=0
    #allocation2 [shape = 'u8[2048]{0}', space=vmem, size = 0x800, scoped, tag = 'output window, operand 0']
    #allocation3 [shape = 's32[2]{0}', space=sflag, size = 0x8, scoped, tag = 'scoped memory for tpu_custom_call.1']
    %10 = vsyncpa [#allocation3], 0
    %s11 = scalar_lea.sflag [#allocation3], 1
    %12 = vsyncpa %s11, 0
    loop: start=0, step=1, limit=4
    $region2: #{tpu_custom_call.1} parent=1 // loop_pre_header
      _
    $region3: #{tpu_custom_call.1} parent=1 // loop_header
      %s14 = sphi 0, %s18
      %p15 = scmp.ge.s32.totalorder %s14, 4
      %s21 = sphi 0, %s33
      %s22 = sphi 0, %s29
      %s23 = sphi 0, %s21
      %s24 = sphi 0, %s22
      %s25 = sphi 0, %s23
      %s26 = sphi 0, %s24
      %s38 = sphi 0, %s40
      %s41 = sphi 0, %s38
      %s42 = sphi 0, %s41
      %s58 = sphi 0, %s42
      %s64 = sphi 0, %s66
      %s67 = sphi 0, %s64
      %s68 = sphi 0, %s67
      %s84 = sphi 0, %s68
      %s92 = sphi 0, %s94
      %s95 = sphi 0, %s92
      %s96 = sphi 0, %s95
      %s112 = sphi 0, %s96
      %s118 = sphi 0, %s120
      %s121 = sphi 0, %s118
      %s122 = sphi 0, %s121
      %s138 = sphi 0, %s122
      %s144 = sphi 0, %s146
      %s147 = sphi 0, %s144
      %s148 = sphi 0, %s147
      %s164 = sphi 0, %s148
      %s172 = sphi 0, %s174
      %s175 = sphi 0, %s172
      %s176 = sphi 0, %s175
      %s192 = sphi 0, %s176
    $region4: #{tpu_custom_call.1} parent=1 // loop_header_branch
      %17 = sbr.rel (%p15) target = $region8
    $region5: #{tpu_custom_call.1} parent=1 // loop_body
      %s19 = ssub.s32 %s14, 1
      %s20 = ssub.s32 %s14, 2
      %s27 = sadd.s32 1, %s22
      %p28 = scmp.ge.s32.totalorder %s27, 1
      %s29 = scalar_select %p28, 0, %s27
      %s30 = sadd.s32 1, %s21
      %s31 = scalar_select %p28, %s30, %s21
      %p32 = scmp.ge.s32.totalorder %s31, 2
      %s33 = scalar_select %p32, 0, %s31
      %s34 = ssub.s32 %s21, %s33
      %s35 = ssub.s32 %s22, %s29
      %s36 = sor.u32 %s34, %s35
      %p37 = scmp.eq.s32.totalorder %s36, 0
      %s39 = sadd.s32 %s38, 1
      %s40 = scalar_select %p37, %s38, %s39
      %p43 = pneg %p37
      %p44 = scmp.eq.s32.totalorder %s14, 1
      %p45 = por %p43, %p44
      %p46 = scmp.ne.s32.totalorder %s38, %s41
      %p47 = scmp.eq.s32.totalorder %s14, 0
      %p48 = por %p46, %p47
      %p49 = scmp.ne.s32.totalorder %s38, %s41
      %p50 = scmp.eq.s32.totalorder %s19, 1
      %p51 = por %p49, %p50
      %p52 = scmp.ne.s32.totalorder %s41, %s42
      %p53 = scmp.eq.s32.totalorder %s19, 0
      %p54 = por %p52, %p53
      %p55 = scmp.ne.s32.totalorder %s41, %s42
      %p56 = scmp.eq.s32.totalorder %s20, 1
      %p57 = por %p55, %p56
      %p59 = scmp.ne.s32.totalorder %s42, %s58
      %p60 = scmp.eq.s32.totalorder %s20, 0
      %p61 = por %p59, %p60
      %s62 = ssub.s32 %s21, %s33
      %p63 = scmp.eq.s32.totalorder %s62, 0
      %s65 = sadd.s32 %s64, 1
      %s66 = scalar_select %p63, %s64, %s65
      %p69 = pneg %p63
      %p70 = scmp.eq.s32.totalorder %s14, 1
      %p71 = por %p69, %p70
      %p72 = scmp.ne.s32.totalorder %s64, %s67
      %p73 = scmp.eq.s32.totalorder %s14, 0
      %p74 = por %p72, %p73
      %p75 = scmp.ne.s32.totalorder %s64, %s67
      %p76 = scmp.eq.s32.totalorder %s19, 1
      %p77 = por %p75, %p76
      %p78 = scmp.ne.s32.totalorder %s67, %s68
      %p79 = scmp.eq.s32.totalorder %s19, 0
      %p80 = por %p78, %p79
      %p81 = scmp.ne.s32.totalorder %s67, %s68
      %p82 = scmp.eq.s32.totalorder %s20, 1
      %p83 = por %p81, %p82
      %p85 = scmp.ne.s32.totalorder %s68, %s84
      %p86 = scmp.eq.s32.totalorder %s20, 0
      %p87 = por %p85, %p86
      %s88 = ssub.s32 %s21, %s33
      %s89 = ssub.s32 %s22, %s29
      %s90 = sor.u32 %s88, %s89
      %p91 = scmp.eq.s32.totalorder %s90, 0
      %s93 = sadd.s32 %s92, 1
      %s94 = scalar_select %p91, %s92, %s93
      %p97 = pneg %p91
      %p98 = scmp.eq.s32.totalorder %s14, 1
      %p99 = por %p97, %p98
      %p100 = scmp.ne.s32.totalorder %s92, %s95
      %p101 = scmp.eq.s32.totalorder %s14, 0
      %p102 = por %p100, %p101
      %p103 = scmp.ne.s32.totalorder %s92, %s95
      %p104 = scmp.eq.s32.totalorder %s19, 1
      %p105 = por %p103, %p104
      %p106 = scmp.ne.s32.totalorder %s95, %s96
      %p107 = scmp.eq.s32.totalorder %s19, 0
      %p108 = por %p106, %p107
      %p109 = scmp.ne.s32.totalorder %s95, %s96
      %p110 = scmp.eq.s32.totalorder %s20, 1
      %p111 = por %p109, %p110
      %p113 = scmp.ne.s32.totalorder %s96, %s112
      %p114 = scmp.eq.s32.totalorder %s20, 0
      %p115 = por %p113, %p114
      %s116 = ssub.s32 %s21, %s33
      %p117 = scmp.eq.s32.totalorder %s116, 0
      %s119 = sadd.s32 %s118, 1
      %s120 = scalar_select %p117, %s118, %s119
      %p123 = pneg %p117
      %p124 = scmp.eq.s32.totalorder %s14, 1
      %p125 = por %p123, %p124
      %p126 = scmp.ne.s32.totalorder %s118, %s121
      %p127 = scmp.eq.s32.totalorder %s14, 0
      %p128 = por %p126, %p127
      %p129 = scmp.ne.s32.totalorder %s118, %s121
      %p130 = scmp.eq.s32.totalorder %s19, 1
      %p131 = por %p129, %p130
      %p132 = scmp.ne.s32.totalorder %s121, %s122
      %p133 = scmp.eq.s32.totalorder %s19, 0
      %p134 = por %p132, %p133
      %p135 = scmp.ne.s32.totalorder %s121, %s122
      %p136 = scmp.eq.s32.totalorder %s20, 1
      %p137 = por %p135, %p136
      %p139 = scmp.ne.s32.totalorder %s122, %s138
      %p140 = scmp.eq.s32.totalorder %s20, 0
      %p141 = por %p139, %p140
      %s142 = ssub.s32 %s21, %s33
      %p143 = scmp.eq.s32.totalorder %s142, 0
      %s145 = sadd.s32 %s144, 1
      %s146 = scalar_select %p143, %s144, %s145
      %p149 = pneg %p143
      %p150 = scmp.eq.s32.totalorder %s14, 1
      %p151 = por %p149, %p150
      %p152 = scmp.ne.s32.totalorder %s144, %s147
      %p153 = scmp.eq.s32.totalorder %s14, 0
      %p154 = por %p152, %p153
      %p155 = scmp.ne.s32.totalorder %s144, %s147
      %p156 = scmp.eq.s32.totalorder %s19, 1
      %p157 = por %p155, %p156
      %p158 = scmp.ne.s32.totalorder %s147, %s148
      %p159 = scmp.eq.s32.totalorder %s19, 0
      %p160 = por %p158, %p159
      %p161 = scmp.ne.s32.totalorder %s147, %s148
      %p162 = scmp.eq.s32.totalorder %s20, 1
      %p163 = por %p161, %p162
      %p165 = scmp.ne.s32.totalorder %s148, %s164
      %p166 = scmp.eq.s32.totalorder %s20, 0
      %p167 = por %p165, %p166
      %s168 = ssub.s32 %s21, %s33
      %s169 = ssub.s32 %s22, %s29
      %s170 = sor.u32 %s168, %s169
      %p171 = scmp.eq.s32.totalorder %s170, 0
      %s173 = sadd.s32 %s172, 1
      %s174 = scalar_select %p171, %s172, %s173
      %p177 = pneg %p171
      %p178 = scmp.eq.s32.totalorder %s14, 1
      %p179 = por %p177, %p178
      %p180 = scmp.ne.s32.totalorder %s172, %s175
      %p181 = scmp.eq.s32.totalorder %s14, 0
      %p182 = por %p180, %p181
      %p183 = scmp.ne.s32.totalorder %s172, %s175
      %p184 = scmp.eq.s32.totalorder %s19, 1
      %p185 = por %p183, %p184
      %p186 = scmp.ne.s32.totalorder %s175, %s176
      %p187 = scmp.eq.s32.totalorder %s19, 0
      %p188 = por %p186, %p187
      %p189 = scmp.ne.s32.totalorder %s175, %s176
      %p190 = scmp.eq.s32.totalorder %s20, 1
      %p191 = por %p189, %p190
      %p193 = scmp.ne.s32.totalorder %s176, %s192
      %p194 = scmp.eq.s32.totalorder %s20, 0
      %p195 = por %p193, %p194
      %p196 = scmp.le.s32.totalorder 1, %s14
      %p197 = scmp.lt.s32.totalorder %s14, 3
      %p198 = pnand %p196, %p197
      %p199 = pneg %p198
      // Predicated region
      $region9: #{tpu_custom_call.1} parent=5 // pred_check
        _
      $region10: #{tpu_custom_call.1} parent=5 // pred_check_branch
        %201 = sbr.rel (%p198) target = $region12
      $region11: #{tpu_custom_call.1} parent=5 // pred_region
        %s202 = ssub.s32 %s14, 1
      $region12: #{tpu_custom_call.1} parent=5 // pred_fallthru
        _
      %p203 = scmp.lt.s32.totalorder %s14, 2
      // Predicated region
      $region13: #{tpu_custom_call.1} parent=5 // pred_check
        %p204 = pneg %p203
      $region14: #{tpu_custom_call.1} parent=5 // pred_check_branch
        %206 = sbr.rel (%p204) target = $region16
      $region15: #{tpu_custom_call.1} parent=5 // pred_region
        // Predicated region
        $region17: #{tpu_custom_call.1} parent=15 // pred_check
          %p207 = pneg %p48
        $region18: #{tpu_custom_call.1} parent=15 // pred_check_branch
          %209 = sbr.rel (%p207) target = $region20
        $region19: #{tpu_custom_call.1} parent=15 // pred_region
          %s210 = smul.u32 2, %s22
          %p211 = scmp.lt.s32.totalorder %s21, 1
          %s212 = scalar_select %p211, %s21, 1
          %p213 = scmp.lt.s32.totalorder %s210, 1
          %s214 = scalar_select %p213, %s210, 1
          %s215 = smul.addr %s214, 2
          %s216 = smul.addr %s212, 4
          %s217 = sadd.s32 %s215, %s216
          %s218 = smul.addr %s217, 8
          %s219 = scalar_lea.vmem %s0, %s218
          %s220 = smul.u32 2, %s22
        $region20: #{tpu_custom_call.1} parent=15 // pred_fallthru
          _
        // Predicated region
        $region21: #{tpu_custom_call.1} parent=15 // pred_check
          %p221 = pneg %p74
        $region22: #{tpu_custom_call.1} parent=15 // pred_check_branch
          %223 = sbr.rel (%p221) target = $region24
        $region23: #{tpu_custom_call.1} parent=15 // pred_region
          %p224 = scmp.lt.s32.totalorder %s21, 1
          %s225 = scalar_select %p224, %s21, 1
          %s226 = smul.addr %s225, 12
          %s227 = smul.addr %s226, 4
          %s228 = scalar_lea.vmem %s1, %s227
        $region24: #{tpu_custom_call.1} parent=15 // pred_fallthru
          _
        // Predicated region
        $region25: #{tpu_custom_call.1} parent=15 // pred_check
          %p229 = pneg %p102
        $region26: #{tpu_custom_call.1} parent=15 // pred_check_branch
          %231 = sbr.rel (%p229) target = $region28
        $region27: #{tpu_custom_call.1} parent=15 // pred_region
          %p232 = scmp.lt.s32.totalorder %s21, 1
          %s233 = scalar_select %p232, %s21, 1
          %p234 = scmp.lt.s32.totalorder %s22, 0
          %s235 = scalar_select %p234, %s22, 0
          %s236 = sadd.s32 %s235, %s233
          %s237 = smul.addr %s236, 2
          %s238 = scalar_lea.vmem %s2, %s237
        $region28: #{tpu_custom_call.1} parent=15 // pred_fallthru
          _
        // Predicated region
        $region29: #{tpu_custom_call.1} parent=15 // pred_check
          %p239 = pneg %p128
        $region30: #{tpu_custom_call.1} parent=15 // pred_check_branch
          %241 = sbr.rel (%p239) target = $region32
        $region31: #{tpu_custom_call.1} parent=15 // pred_region
          %p242 = scmp.lt.s32.totalorder %s21, 1
          %s243 = scalar_select %p242, %s21, 1
          %s244 = smul.addr %s243, 4
          %s245 = smul.addr %s244, 4
          %s246 = scalar_lea.vmem %s3, %s245
        $region32: #{tpu_custom_call.1} parent=15 // pred_fallthru
          _
        // Predicated region
        $region33: #{tpu_custom_call.1} parent=15 // pred_check
          %p247 = pneg %p154
        $region34: #{tpu_custom_call.1} parent=15 // pred_check_branch
          %249 = sbr.rel (%p247) target = $region36
        $region35: #{tpu_custom_call.1} parent=15 // pred_region
          %p250 = scmp.lt.s32.totalorder %s21, 1
          %s251 = scalar_select %p250, %s21, 1
          %s252 = scalar_lea.vmem %s4, %s251
        $region36: #{tpu_custom_call.1} parent=15 // pred_fallthru
          _
      $region16: #{tpu_custom_call.1} parent=5 // pred_fallthru
        _
      %p253 = scmp.le.s32.totalorder 1, %s14
      %p254 = scmp.lt.s32.totalorder %s14, 3
      %p255 = pnand %p253, %p254
      %p256 = pneg %p255
      // Predicated region
      $region37: #{tpu_custom_call.1} parent=5 // pred_check
        _
      $region38: #{tpu_custom_call.1} parent=5 // pred_check_branch
        %258 = sbr.rel (%p255) target = $region40
      $region39: #{tpu_custom_call.1} parent=5 // pred_region
        %s259 = ssub.s32 %s14, 1
        %s260 = smul.u32 2, %s24
        %p261 = scmp.lt.s32.totalorder %s23, 1
        %s262 = scalar_select %p261, %s23, 1
        %p263 = scmp.lt.s32.totalorder %s260, 1
        %s264 = scalar_select %p263, %s260, 1
        %s265 = smul.addr %s264, 2
        %s266 = smul.addr %s262, 4
        %s267 = sadd.s32 %s265, %s266
        %s268 = smul.addr %s267, 8
        %s269 = scalar_lea.vmem %s0, %s268
        %p270 = pneg %p54
        %p271 = pneg %p51
        %p272 = scmp.lt.s32.totalorder %s23, 1
        %s273 = scalar_select %p272, %s23, 1
        %s274 = smul.addr %s273, 12
        %s275 = smul.addr %s274, 4
        %s276 = scalar_lea.vmem %s1, %s275
        %p277 = pneg %p80
        %p278 = pneg %p77
        %p279 = scmp.lt.s32.totalorder %s23, 1
        %s280 = scalar_select %p279, %s23, 1
        %p281 = scmp.lt.s32.totalorder %s24, 0
        %s282 = scalar_select %p281, %s24, 0
        %s283 = sadd.s32 %s282, %s280
        %s284 = smul.addr %s283, 2
        %s285 = scalar_lea.vmem %s2, %s284
        %p286 = pneg %p108
        %p287 = pneg %p105
        %p288 = scmp.lt.s32.totalorder %s23, 1
        %s289 = scalar_select %p288, %s23, 1
        %s290 = smul.addr %s289, 4
        %s291 = smul.addr %s290, 4
        %s292 = scalar_lea.vmem %s3, %s291
        %p293 = pneg %p134
        %p294 = pneg %p131
        %p295 = scmp.lt.s32.totalorder %s23, 1
        %s296 = scalar_select %p295, %s23, 1
        %s297 = scalar_lea.vmem %s4, %s296
        %p298 = pneg %p160
        %p299 = pneg %p157
        %p300 = pneg %p188
        %p301 = pneg %p185
        %s302 = sand.u32 %s175, 1
        %s303 = scalar_lea.sflag [#allocation3], %s302
        %s304 = sand.u32 %s175, 1
        %s305 = smul.addr %s304, 2
        %s306 = scalar_lea.vmem [#allocation2], %s305
        %s307 = smul.u32 2, %s24
        %p308 = scmp.lt.s32.totalorder %s23, 1
        %s309 = scalar_select %p308, %s23, 1
        %p310 = scmp.lt.s32.totalorder %s307, 1
        %s311 = scalar_select %p310, %s307, 1
        %s312 = smul.addr %s311, 2
        %s313 = smul.addr %s309, 4
        %s314 = sadd.s32 %s312, %s313
        %s315 = smul.addr %s314, 8
        %s316 = scalar_lea.vmem %s0, %s315
        %s317 = smul.u32 2, %s24
        %p318 = scmp.lt.s32.totalorder %s23, 1
        %s319 = scalar_select %p318, %s23, 1
        %s320 = smul.addr %s319, 12
        %s321 = smul.addr %s320, 4
        %s322 = scalar_lea.vmem %s1, %s321
        %p323 = scmp.lt.s32.totalorder %s23, 1
        %s324 = scalar_select %p323, %s23, 1
        %p325 = scmp.lt.s32.totalorder %s24, 0
        %s326 = scalar_select %p325, %s24, 0
        %s327 = sadd.s32 %s326, %s324
        %s328 = smul.addr %s327, 2
        %s329 = scalar_lea.vmem %s2, %s328
        %p330 = scmp.lt.s32.totalorder %s23, 1
        %s331 = scalar_select %p330, %s23, 1
        %s332 = smul.addr %s331, 4
        %s333 = smul.addr %s332, 4
        %s334 = scalar_lea.vmem %s3, %s333
        %p335 = scmp.lt.s32.totalorder %s23, 1
        %s336 = scalar_select %p335, %s23, 1
        %s337 = scalar_lea.vmem %s4, %s336
        %v339 = vld [vmem:[%s316] sm:$0xff]
        %v340 = vld [vmem:[%s316 + $0x8] sm:$0xff]
        %v341 = vld [vmem:[%s316 + $0x10] sm:$0xff]
        %v342 = vld [vmem:[%s316 + $0x18] sm:$0xff]
        %vm347 = vcmask 1040384
        %v348 = vrot.slane %v339, 7
        %v349 = vrot.slane %v340, 7
        %v350 = vsel %vm347, %v348, %v349
        %v351 = vrot.slane %v341, 7
        %v352 = vrot.slane %v342, 7
        %v353 = vsel %vm347, %v351, %v352
        %v358 = vsel %vm347, 0.0, %v348
        %v359 = vsel %vm347, 0.0, %v351
        %vm360 = vcmask 1046528
        %v361 = vrot.slane %v339, 1
        %v362 = vrot.slane %v340, 1
        %v363 = vsel %vm360, %v361, %v362
        %v364 = vrot.slane %v341, 1
        %v365 = vrot.slane %v342, 1
        %v366 = vsel %vm360, %v364, %v365
        %v369 = vsel %vm360, %v362, 0.0
        %v370 = vsel %vm360, %v365, 0.0
        %371 = vrot.lane.b32.xlu0 %v339, 32
        %v372 = vpop.permute.xlu0 %371
        %373 = vrot.lane.b32.xlu0 %v340, 32
        %v374 = vpop.permute.xlu0 %373
        %375 = vrot.lane.b32.xlu0 %v341, 32
        %v376 = vpop.permute.xlu0 %375
        %377 = vrot.lane.b32.xlu0 %v342, 32
        %v378 = vpop.permute.xlu0 %377
        %385 = vrot.lane.b32.xlu0 %v363, 64
        %v386 = vpop.permute.xlu0 %385
        %387 = vrot.lane.b32.xlu0 %v369, 64
        %v388 = vpop.permute.xlu0 %387
        %389 = vrot.lane.b32.xlu0 %v366, 64
        %v390 = vpop.permute.xlu0 %389
        %391 = vrot.lane.b32.xlu0 %v370, 64
        %v392 = vpop.permute.xlu0 %391
        %vm397 = vcmask 261120
        %v398 = vsel %vm397, %v358, %v372
        %v399 = vsel %vm397, %v350, %v374
        %v400 = vsel %vm397, %v359, %v376
        %v401 = vsel %vm397, %v353, %v378
        %vm402 = vcmask 523264
        %v403 = vsel %vm402, %v398, %v386
        %v404 = vsel %vm402, %v399, %v388
        %v405 = vsel %vm402, %v400, %v390
        %v406 = vsel %vm402, %v401, %v392
        %v407 = vpack.c.bf16 %v404, %v403
        %v408 = vpack.c.bf16 %v406, %v405
        %v409 = vld [vmem:[%s337] sm:$0x1]
        %v410 = vld [vmem:[%s322] sm:$0xf]
        %v411 = vld [vmem:[%s322 + $0x4] sm:$0xf]
        %v412 = vld [vmem:[%s322 + $0x8] sm:$0xf]
        %v413 = vld [vmem:[%s322 + $0xc] sm:$0xf]
        %v414 = vld [vmem:[%s322 + $0x10] sm:$0xf]
        %v415 = vld [vmem:[%s322 + $0x14] sm:$0xf]
        %v416 = vld [vmem:[%s322 + $0x18] sm:$0xf]
        %v417 = vld [vmem:[%s322 + $0x1c] sm:$0xf]
        %v418 = vld [vmem:[%s322 + $0x20] sm:$0xf]
        %v419 = vld [vmem:[%s322 + $0x24] sm:$0xf]
        %v420 = vld [vmem:[%s322 + $0x28] sm:$0xf]
        %v421 = vld [vmem:[%s322 + $0x2c] sm:$0xf]
        %v423 = vperm.slane %v409, 0
        %v437 = vunpack.c.l.b16 %v410
        %v438 = vunpack.c.l.b16 %v411
        %v439 = vunpack.c.l.b16 %v412
        %v440 = vunpack.c.l.b16 %v413
        %v441 = vunpack.c.l.b16 %v414
        %v442 = vunpack.c.l.b16 %v415
        %v443 = vunpack.c.l.b16 %v416
        %v444 = vunpack.c.l.b16 %v417
        %v445 = vunpack.c.l.b16 %v418
        %v446 = vunpack.c.l.b16 %v419
        %v447 = vunpack.c.l.b16 %v420
        %v448 = vunpack.c.l.b16 %v421
        %v449 = vpack.c.b16 %v438, %v437
        %v450 = vpack.c.b16 %v440, %v439
        %v451 = vpack.c.b16 %v442, %v441
        %v452 = vpack.c.b16 %v444, %v443
        %v453 = vpack.c.b16 %v446, %v445
        %v454 = vpack.c.b16 %v448, %v447
        %vm461 = vcmask 785408
        %v463 = vsel %vm461, %v407, 0
        %v466 = vsel %vm461, %v408, 0
        %468 = vmatpush.bf16.msra.mxu0 0
        %469 = vmatpush.bf16.msra.mxu0 0
        %470 = vmatpush.bf16.msra.mxu0 %v454
        %471 = vmatpush.bf16.msra.mxu0 %v453
        %472 = vmatpush.bf16.msra.mxu0 %v452
        %473 = vmatpush.bf16.msra.mxu0 %v451
        %474 = vmatpush.bf16.msra.mxu0 %v450
        %475 = vmatpush.bf16.msra.mxu0 %v449
        %476 = vmatmul.bf16.gmra.mxu0 %v463
        %v477 = vpop.f32.mrf.mxu0
        %v478 = vadd.f32 %v423, %v477
        %v479 = vpop.f32.mrf.mxu0
        %v480 = vadd.f32 %v423, %v479
        %481 = vmatmul.bf16.gmra.mxu0 %v466
        %v482 = vpop.f32.mrf.mxu0
        %v483 = vadd.f32 %v423, %v482
        %v484 = vpop.f32.mrf.mxu0
        %v485 = vadd.f32 %v423, %v484
        %486 = vdwg.mxu0
        %v487 = vmax.f32 %v478, 0.0
        %v488 = vmax.f32 %v480, 0.0
        %v489 = vmax.f32 %v483, 0.0
        %v490 = vmax.f32 %v485, 0.0
        %v491 = vsel %vm397, %v487, 0.0
        %v492 = vsel %vm397, %v488, 0.0
        %v493 = vadd.f32 %v491, %v492
        %v494 = vrot.slane %v493, 4
        %v495 = vadd.f32 %v493, %v494
        %v496 = vrot.slane %v495, 2
        %v497 = vadd.f32 %v495, %v496
        %v498 = vrot.slane %v497, 1
        %v499 = vadd.f32 %v497, %v498
        %v500 = vsel %vm397, %v489, 0.0
        %v501 = vsel %vm397, %v490, 0.0
        %v502 = vadd.f32 %v500, %v501
        %v503 = vrot.slane %v502, 4
        %v504 = vadd.f32 %v502, %v503
        %v505 = vrot.slane %v504, 2
        %v506 = vadd.f32 %v504, %v505
        %v507 = vrot.slane %v506, 1
        %v508 = vadd.f32 %v506, %v507
        %v509 = vrcp.pop 16.0
        %v510 = vmul.f32 16.0, %v509
        %v511 = vsub.f32 1.0, %v510
        %v512 = vmul.f32 %v509, %v511
        %v513 = vadd.f32 %v509, %v512
        %vm514 = vweird.f32 %v509
        %v515 = vsel %vm514, %v509, %v513
        %v516 = vmul.f32 %v499, %v515
        %v517 = vmul.f32 %v508, %v515
        %v518 = vpack.c.bf16 %v516, %v516
        %v519 = vpack.c.bf16 %v517, %v517
        %v520 = vld [vmem:[%s334] sm:$0xf]
        %v521 = vld [vmem:[%s334 + $0x4] sm:$0xf]
        %v522 = vld [vmem:[%s334 + $0x8] sm:$0xf]
        %v523 = vld [vmem:[%s334 + $0xc] sm:$0xf]
        %v526 = vunpack.c.l.b16 %v518
        %v527 = vunpack.c.l.b16 %v519
        %vm528 = vcmask 1041409
        %v529 = vsel %vm528, %v527, %v526
        %v530 = vpack.c.b16 %v529, %v529
        %v535 = vunpack.c.l.b16 %v520
        %v536 = vunpack.c.l.b16 %v521
        %v537 = vunpack.c.l.b16 %v522
        %v538 = vunpack.c.l.b16 %v523
        %v539 = vpack.c.b16 %v536, %v535
        %v540 = vpack.c.b16 %v538, %v537
        %543 = vrot.lane.b32.xlu0 %v423, 96
        %v544 = vpop.permute.xlu0 %543
        %v547 = vsel %vm397, %v530, 0
        %549 = vmatpush.bf16.msra.mxu0 0
        %550 = vmatpush.bf16.msra.mxu0 0
        %551 = vmatpush.bf16.msra.mxu0 0
        %552 = vmatpush.bf16.msra.mxu0 0
        %553 = vmatpush.bf16.msra.mxu0 0
        %554 = vmatpush.bf16.msra.mxu0 0
        %555 = vmatpush.bf16.msra.mxu0 %v540
        %556 = vmatpush.bf16.msra.mxu0 %v539
        %557 = vmatmul.bf16.gmra.mxu0 %v547
        %v558 = vpop.f32.mrf.mxu0
        %v559 = vadd.f32 %v544, %v558
        %v560 = vpop.f32.mrf.mxu0
        %561 = vdwg.mxu0
        %v562 = vld [vmem:[%s329] sm:$0x3]
        %v563 = vmul.f32 %v562, %v559
        %v564 = vxor.u32 %v563, 2147483648
        %v565 = vmul.f32 %v564, 1.442695
        %v566 = vpow.pop %v565
        %v567 = vadd.f32 %v566, 1.0
        %v568 = vrcp.pop %v567
        %v569 = vmul.f32 %v567, %v568
        %v570 = vsub.f32 1.0, %v569
        %v571 = vmul.f32 %v568, %v570
        %v572 = vadd.f32 %v568, %v571
        %vm573 = vweird.f32 %v567
        %vm574 = vweird.f32 %v568
        %vm575 = vmor %vm573, %vm574
        %v576 = vsel %vm575, %v568, %v572
        %v577 = vand.u32 2147483647, %v567
        %vm578 = vcmp.eq.f32.partialorder %v577, 8.507059e+37
        %v579 = vand.u32 %v567, 2147483648
        %v580 = vor.u32 1.1754944e-38, %v579
        %v581 = vsel %vm578, %v580, %v576
        %v582 = vmul.f32 1.0, %v581
        %v583 = vsub.f32 1.0, %v582
        %v584 = vadd.f32 %v583, %v562
        %586 = vrot.lane.b32.xlu0 %v559, 96
        %v587 = vpop.permute.xlu0 %586
        %v589 = vadd.f32 %v584, %v587
        %vm590 = vcmask 254976
        %591 = vst.msk [vmem:[%s306] sm:$0x3] %vm590, %v589
        %s592 = sand.u32 %s175, 1
        %s593 = scalar_lea.sflag [#allocation3], %s592
        %s594 = sand.u32 %s175, 1
        %s595 = smul.addr %s594, 2
        %s596 = scalar_lea.vmem [#allocation2], %s595
        // Predicated region
        $region41: #{tpu_custom_call.1} parent=39 // pred_check
          %p597 = pneg %p185
        $region42: #{tpu_custom_call.1} parent=39 // pred_check_branch
          %599 = sbr.rel (%p597) target = $region44
        $region43: #{tpu_custom_call.1} parent=39 // pred_region
          %601 = vsyncadd %s593, 0
          %s602 = sadd.s32 %s24, %s23
          %s603 = smul.addr %s602, 2
          %s604 = scalar_lea.hbm %s5, %s603
          %s606 = sshll.u32 %s596, 4
          %s607 = int_to_ptr.vmem [resolvable:$true] %s606
          %s608 = sshll.u32 %s604, 4
          %s609 = int_to_ptr.hbm [resolvable:$true] %s608
          %611 = dma.vmem_to_hbm [thread:$0]  %s607, 32, %s609, %s593
        $region44: #{tpu_custom_call.1} parent=39 // pred_fallthru
          _
      $region40: #{tpu_custom_call.1} parent=5 // pred_fallthru
        _
      %p612 = scmp.le.s32.totalorder 2, %s14
      // Predicated region
      $region45: #{tpu_custom_call.1} parent=5 // pred_check
        %p613 = pneg %p612
      $region46: #{tpu_custom_call.1} parent=5 // pred_check_branch
        %615 = sbr.rel (%p613) target = $region48
      $region47: #{tpu_custom_call.1} parent=5 // pred_region
        %s616 = ssub.s32 %s14, 2
        // Predicated region
        $region49: #{tpu_custom_call.1} parent=47 // pred_check
          %p617 = pneg %p191
        $region50: #{tpu_custom_call.1} parent=47 // pred_check_branch
          %619 = sbr.rel (%p617) target = $region52
        $region51: #{tpu_custom_call.1} parent=47 // pred_region
          %s620 = sand.u32 %s176, 1
          %s621 = scalar_lea.sflag [#allocation3], %s620
          %s622 = sand.u32 %s176, 1
          %s623 = smul.addr %s622, 2
          %s624 = scalar_lea.vmem [#allocation2], %s623
          %626 = dma.done %s621, 32
        $region52: #{tpu_custom_call.1} parent=47 // pred_fallthru
          _
      $region48: #{tpu_custom_call.1} parent=5 // pred_fallthru
        _
    $region6: #{tpu_custom_call.1} parent=1 // loop_footer
      %s18 = sadd.s32 1, %s14
    $region7: #{tpu_custom_call.1} parent=1 // loop_footer_branch
      %13 = sbr.rel target = $region3
    $region8: #{tpu_custom_call.1} parent=1 // loop_exit
      _
    %627 = vsyncpa [#allocation3], 1
    %s628 = scalar_lea.sflag [#allocation3], 1
    %629 = vsyncpa %s628, 1

</llo_original>
